<compile_context>
chip_gen: v6e
topology: v6e:2x2x1
jax: 0.10.0
libtpu: 0.0.40
codegen_flags: <defaults>
</compile_context>

<pallas_src>
import jax
import jax.numpy as jnp
from jax.experimental import pallas as pl
from jax.experimental.pallas import tpu as pltpu


def _round_up(x, m):
    return ((x + m - 1) // m) * m


# ----------------------------------------------------------------------------
# Kernels
# ----------------------------------------------------------------------------

def _gemm_bias_single_k_kernel(x_ref, w_ref, b_ref, o_ref):
    """Single K step (Kp == tk): direct MXU -> bias epilogue -> store.

    No scratch, no phases: avoids zero-init / acc load+store / copy passes.
    """
    o_ref[...] = (jnp.dot(x_ref[...], w_ref[...],
                          preferred_element_type=jnp.float32)
                  + b_ref[...]).astype(o_ref.dtype)


def _gemm_bias_multi_k_f32_kernel(x_ref, w_ref, b_ref, o_ref):
    """Multi K step, f32 output: accumulate directly into the output block.

    The output block index is k-invariant, so it stays VMEM-resident across
    the K axis; the bias is folded into the k==0 init (the init store happens
    anyway, so the broadcast-add is free) and there is no epilogue pass.
    """
    @pl.when(pl.program_id(2) == 0)
    def _():
        o_ref[...] = jnp.broadcast_to(b_ref[...], o_ref.shape)

    o_ref[...] += jnp.dot(x_ref[...], w_ref[...],
                          preferred_element_type=jnp.float32)


def _gemm_bias_multi_k_cast_kernel(x_ref, w_ref, b_ref, o_ref, acc_ref):
    """Multi K step with a non-f32 output dtype: f32 scratch acc, cast at end."""
    k = pl.program_id(2)

    @pl.when(k == 0)
    def _():
        acc_ref[...] = jnp.broadcast_to(b_ref[...], acc_ref.shape)

    acc_ref[...] += jnp.dot(x_ref[...], w_ref[...],
                            preferred_element_type=jnp.float32)

    @pl.when(k == pl.num_programs(2) - 1)
    def _():
        o_ref[...] = acc_ref[...].astype(o_ref.dtype)


# ----------------------------------------------------------------------------
# Host-side preparation (done ONCE per head-set, cached by the caller)
# ----------------------------------------------------------------------------

def prepare_fused_heads(head_weights, head_biases, *,
                        compute_dtype=jnp.bfloat16,
                        tn_max=512, tk_max=None):
    """Fuse all continual heads into one padded weight/bias, pick tiling.

    Args:
      head_weights: list of per-head weights in PyTorch layout, W_i [C_i, D].
      head_biases:  list of per-head biases, b_i [C_i].
      compute_dtype: MXU input dtype (default bf16; accumulation stays f32).
      tn_max / tk_max: tile caps (defaults keep the footprint VMEM-safe on
        v5e/v6e/v7x).

    Returns a dict holding the pre-padded, pre-cast fused parameters and the
    tiling metadata.  Call this once per update(); reuse the result every
    forward so no per-call weight traffic is generated.
    """
    D = int(head_weights[0].shape[1])
    N = int(sum(int(w.shape[0]) for w in head_weights))
    compute_dtype = jnp.dtype(compute_dtype)
    if tk_max is None:
        tk_max = 2048 if compute_dtype.itemsize == 2 else 1024

    # Fuse: W_all = concat_i(W_i.T) -> [D, N], b_all -> [N].
    w_all = jnp.concatenate([jnp.transpose(w) for w in head_weights], axis=1)
    b_all = jnp.concatenate(list(head_biases), axis=0)

    # Lane/sublane friendly padded extents.
    Np = _round_up(N, 128)
    Kp = _round_up(D, 128)

    # N tile: largest lane-dense divisor of Np <= tn_max; if that leaves a
    # single output tile, split to >=2 tiles (still 128-multiples) so both
    # v7x TensorCores have a parallel tile to work on.
    tn_cands = [t for t in (512, 384, 256, 128) if t <= tn_max and Np % t == 0]
    tn = tn_cands[0] if tn_cands else Np
    if Np // tn < 2:
        for t in tn_cands:
            if Np // t >= 2:
                tn = t
                break

    # K tile: single K step whenever the whole (padded) embed dim fits the cap
    # (the common case -> phase-free kernel); otherwise the largest 128-multiple
    # divisor under the cap.
    if Kp <= tk_max:
        tk = Kp
    else:
        tk = max(t for t in (2048, 1024, 512, 384, 256, 128)
                 if t <= tk_max and Kp % t == 0)

    # Pre-pad and pre-cast ONCE.  Zero K columns contribute nothing to the
    # dots; zero N columns are sliced away in the forward.
    w_p = jnp.pad(w_all, ((0, Kp - D), (0, Np - N))).astype(compute_dtype)
    b_p = jnp.pad(b_all, (0, Np - N)).astype(jnp.float32).reshape(1, Np)

    return {
        "w_p": w_p, "b_p": b_p,
        "D": D, "N": N, "Kp": Kp, "Np": Np, "tk": tk, "tn": tn,
        "compute_dtype": compute_dtype,
    }


# ----------------------------------------------------------------------------
# Forward (per-call path: only x is padded / cast)
# ----------------------------------------------------------------------------

def fused_heads_forward(x, fused, *, out_dtype=jnp.float32):
    """Fused forward: logits = x @ W_all + b_all == torch.cat([head_i(x)])."""
    B, D = x.shape
    assert D == fused["D"], (D, fused["D"])

    compute_dtype = fused["compute_dtype"]
    Kp, Np = fused["Kp"], fused["Np"]
    tk, tn = fused["tk"], fused["tn"]
    w_p, b_p, N = fused["w_p"], fused["b_p"], fused["N"]
    out_dtype = jnp.dtype(out_dtype)

    # bf16 packs 2 rows per sublane -> pad batch to a multiple of 16; f32 to 8.
    sub = 16 if compute_dtype.itemsize == 2 else 8
    tm = min(256, _round_up(B, sub))
    Mp = _round_up(B, tm)

    x_p = jnp.pad(x.astype(compute_dtype), ((0, Mp - B), (0, Kp - D)))

    nk = Kp // tk
    grid = (Mp // tm, Np // tn, nk)

    # Deeper multi-buffering only when there are enough K steps for it to
    # hide exposed weight DMA (weight-streaming regime).
    if nk >= 3:
        x_spec = pl.BlockSpec((tm, tk), lambda i, j, k: (i, k),
                              pipeline_mode=pl.Buffered(3))
        w_spec = pl.BlockSpec((tk, tn), lambda i, j, k: (k, j),
                              pipeline_mode=pl.Buffered(3))
    else:
        x_spec = pl.BlockSpec((tm, tk), lambda i, j, k: (i, k))
        w_spec = pl.BlockSpec((tk, tn), lambda i, j, k: (k, j))
    b_spec = pl.BlockSpec((1, tn), lambda i, j, k: (0, j))
    o_spec = pl.BlockSpec((tm, tn), lambda i, j, k: (i, j))

    if nk == 1:
        kernel = _gemm_bias_single_k_kernel
        scratch = []
    elif out_dtype == jnp.dtype(jnp.float32):
        kernel = _gemm_bias_multi_k_f32_kernel
        scratch = []
    else:
        kernel = _gemm_bias_multi_k_cast_kernel
        scratch = [pltpu.VMEM((tm, tn), jnp.float32)]

    out_p = pl.pallas_call(
        kernel,
        out_shape=jax.ShapeDtypeStruct((Mp, Np), out_dtype),
        grid=grid,
        in_specs=[x_spec, w_spec, b_spec],
        out_specs=o_spec,
        scratch_shapes=scratch,
        compiler_params=pltpu.CompilerParams(
            dimension_semantics=("parallel", "parallel", "arbitrary")),
    )(x_p, w_p, b_p)

    return {"logits": out_p[:B, :N]}


def simple_continual_linear_forward(x, head_weights, head_biases, *,
                                    compute_dtype=jnp.bfloat16,
                                    out_dtype=jnp.float32):
    """One-shot convenience wrapper (prepares + runs; prefer caching
    prepare_fused_heads() per head-set in real use)."""
    fused = prepare_fused_heads(head_weights, head_biases,
                                compute_dtype=compute_dtype)
    return fused_heads_forward(x, fused, out_dtype=out_dtype)


def _trunc_normal(key, shape, std=0.02):
    # Mirrors trunc_normal_(w, std=0.02) (truncation at +/- 2 std).
    return std * jax.random.truncated_normal(key, -2.0, 2.0, shape, jnp.float32)


if __name__ == "__main__":
    # Small shapes consistent with the module: embed_dim=32, batch=8, an
    # initial head of 12 classes plus one update() head of 20 classes
    # (heterogeneous class counts are supported by the fused layout).
    B, D = 8, 32
    head_sizes = (12, 20)

    key = jax.random.PRNGKey(0)
    kx, kw0, kw1 = jax.random.split(key, 3)

    x = jax.random.normal(kx, (B, D), jnp.float32)
    head_weights = [_trunc_normal(kw0, (head_sizes[0], D)),
                    _trunc_normal(kw1, (head_sizes[1], D))]
    head_biases = [jnp.zeros((c,), jnp.float32) for c in head_sizes]

    ref = jnp.concatenate(
        [jnp.dot(x, w.T, preferred_element_type=jnp.float32) + b
         for w, b in zip(head_weights, head_biases)], axis=1)

    # Default path: weights pre-fused ONCE in bf16 (MXU peak / half W bytes),
    # f32 accumulation, f32 logits; per-call work pads only x.
    fused_bf16 = prepare_fused_heads(head_weights, head_biases)
    out = fused_heads_forward(x, fused_bf16)
    logits = jax.block_until_ready(out["logits"])
    assert logits.shape == (B, sum(head_sizes))
    assert jnp.allclose(logits, ref, atol=1e-2, rtol=1e-2)

    # f32 compute path for tight parity with the reference.
    fused_f32 = prepare_fused_heads(head_weights, head_biases,
                                    compute_dtype=jnp.float32)
    logits_f32 = jax.block_until_ready(fused_heads_forward(x, fused_f32)["logits"])
    assert jnp.allclose(logits_f32, ref, atol=5e-5, rtol=5e-5)

    # Exercise the multi-K accumulate-into-output kernel (force K tiling by
    # capping tk below the padded embed dim of a second, larger head-set).
    D2 = 256
    kx2, kw2, kw3 = jax.random.split(jax.random.PRNGKey(1), 3)
    x2 = jax.random.normal(kx2, (B, D2), jnp.float32)
    hw2 = [_trunc_normal(kw2, (head_sizes[0], D2)),
           _trunc_normal(kw3, (head_sizes[1], D2))]
    hb2 = [jnp.zeros((c,), jnp.float32) for c in head_sizes]
    ref2 = jnp.concatenate(
        [jnp.dot(x2, w.T, preferred_element_type=jnp.float32) + b
         for w, b in zip(hw2, hb2)], axis=1)
    fused_mk = prepare_fused_heads(hw2, hb2, compute_dtype=jnp.float32,
                                   tk_max=128)
    logits_mk = jax.block_until_ready(fused_heads_forward(x2, fused_mk)["logits"])
    assert logits_mk.shape == (B, sum(head_sizes))
    assert jnp.allclose(logits_mk, ref2, atol=5e-3, rtol=5e-3)

    print("KERNEL_OK")
</pallas_src>

<mosaic_0001>
module attributes {stable_mosaic.version = 11 : i64} {
  func.func @_gemm_bias_single_k_kernel(%arg0: i32, %arg1: i32, %arg2: i32, %arg3: memref<16x128xbf16, #tpu.memory_space<vmem>>, %arg4: memref<128x128xbf16, #tpu.memory_space<vmem>>, %arg5: memref<1x128xf32, #tpu.memory_space<vmem>>, %arg6: memref<16x128xf32, #tpu.memory_space<vmem>>) attributes {dimension_semantics = [#tpu.dimension_semantics<parallel>, #tpu.dimension_semantics<parallel>, #tpu.dimension_semantics<arbitrary>], iteration_bounds = array<i64: 1, 1, 1>, scalar_prefetch = 0 : i64, scratch_operands = 0 : i64, tpu.core_type = #tpu.core_type<tc>, window_params = [{transform_indices = @transform_0, window_bounds = array<i64: 16, 128>}, {transform_indices = @transform_1, window_bounds = array<i64: 128, 128>}, {transform_indices = @transform_2, window_bounds = array<i64: 1, 128>}, {transform_indices = @transform_3, window_bounds = array<i64: 16, 128>}]} {
    %c0 = arith.constant 0 : index
    %c0_0 = arith.constant 0 : index
    %0 = vector.load %arg3[%c0, %c0_0] : memref<16x128xbf16, #tpu.memory_space<vmem>>, vector<16x128xbf16>
    %c0_1 = arith.constant 0 : index
    %c0_2 = arith.constant 0 : index
    %1 = vector.load %arg4[%c0_1, %c0_2] : memref<128x128xbf16, #tpu.memory_space<vmem>>, vector<128x128xbf16>
    %cst = arith.constant dense<0.000000e+00> : vector<16x128xf32>
    %2 = tpu.matmul %0, %1, %cst {dimension_numbers = #tpu.dot_dimension_numbers<[1], [0], [0], [1], [0, 0, 1, 1], [], []>} : vector<16x128xbf16>, vector<128x128xbf16>, vector<16x128xf32> -> vector<16x128xf32>
    %c0_3 = arith.constant 0 : index
    %c0_4 = arith.constant 0 : index
    %3 = vector.load %arg5[%c0_3, %c0_4] : memref<1x128xf32, #tpu.memory_space<vmem>>, vector<1x128xf32>
    %4 = vector.broadcast %3 : vector<1x128xf32> to vector<16x128xf32>
    %5 = arith.addf %2, %4 : vector<16x128xf32>
    %c0_5 = arith.constant 0 : index
    %c0_6 = arith.constant 0 : index
    %6 = vector.load %arg6[%c0_5, %c0_6] : memref<16x128xf32, #tpu.memory_space<vmem>>, vector<16x128xf32>
    tpu.vector_store %arg6[%c0_5, %c0_6], %5 {strides = array<i32>} : memref<16x128xf32, #tpu.memory_space<vmem>>, vector<16x128xf32>,
    return
  }
  func.func @transform_0(%arg0: i32, %arg1: i32, %arg2: i32) -> (i32, i32) {
    %c0_i32 = arith.constant 0 : i32
    return %arg0, %arg2 : i32, i32
  }
  func.func @transform_1(%arg0: i32, %arg1: i32, %arg2: i32) -> (i32, i32) {
    %c0_i32 = arith.constant 0 : i32
    return %arg2, %arg1 : i32, i32
  }
  func.func @transform_2(%arg0: i32, %arg1: i32, %arg2: i32) -> (i32, i32) {
    %c0_i32 = arith.constant 0 : i32
    %c0_i32_0 = arith.constant 0 : i32
    return %c0_i32, %arg1 : i32, i32
  }
  func.func @transform_3(%arg0: i32, %arg1: i32, %arg2: i32) -> (i32, i32) {
    %c0_i32 = arith.constant 0 : i32
    return %arg0, %arg1 : i32, i32
  }
}

</mosaic_0001>

<llo_original>
// kernel: tpu_custom_call.1
$region0: #{tpu_custom_call.1}
  #allocation0 [shape = 'u32[]', space=smem, size = 0x4, offset = 0x4, fixed_abs, tag = 'smem constant byte address 0x4 - core index']
  #allocation1 [shape = 'u32[144,128]{1,0:T(1,128)}', space=vmem, size = 0x12000, scoped, tag = 'internal scratch']
  %s0 = inlined_call_operand.hbm [shape: bf16[16,128], index: 0, kind: input, shape index: {}]
  %s1 = inlined_call_operand.hbm [shape: bf16[128,128], index: 1, kind: input, shape index: {}]
  %s2 = inlined_call_operand.vmem [shape: f32[1,128], index: 2, kind: input, shape index: {}]
  %s3 = inlined_call_operand.hbm [shape: f32[16,128], index: 3, kind: output, shape index: {}]
  %s4 = sld [smem:[#allocation0]]
  $region30: #{tpu_custom_call.1} parent=0
    _
  %s6 = ssub.s32 1, %s4
  %s7 = scalar_select 0, %s6, %s4
  $region1: #{tpu_custom_call.1} parent=0
    #allocation2 [shape = 'u8[4096]{0}', space=vmem, size = 0x1000, scoped, tag = 'input window, operand 0, single buffered']
    #allocation3 [shape = 's32[1]{0}', space=sflag, size = 0x4, scoped, tag = 'scoped memory for tpu_custom_call.1']
    #allocation4 [shape = 's32[1]{0}', space=sflag, size = 0x4, scoped, tag = 'scoped memory for tpu_custom_call.1']
    #allocation5 [shape = 'u8[32768]{0}', space=vmem, size = 0x8000, scoped, tag = 'input window, operand 1, single buffered']
    #allocation6 [shape = 's32[1]{0}', space=sflag, size = 0x4, scoped, tag = 'scoped memory for tpu_custom_call.1']
    #allocation7 [shape = 'u8[8192]{0}', space=vmem, size = 0x2000, scoped, tag = 'output window, operand 0, single buffered']
    %8 = vsyncpa [#allocation3], 0
    %9 = vsyncpa [#allocation6], 0
    %10 = vsyncpa [#allocation4], 0
    // Predicated region
    $region2: #{tpu_custom_call.1} parent=1 // pred_check
      _
    $region3: #{tpu_custom_call.1} parent=1 // pred_check_branch
      %12 = sbr.rel (0) target = $region5
    $region4: #{tpu_custom_call.1} parent=1 // pred_region
      %s14 = ssub.s32 128, 128
      %15 = vsyncadd [#allocation3], %s14
      %s16 = sshll.u32 [#allocation2], 4
      %s17 = int_to_ptr.vmem [resolvable:$true] %s16
      %22 = dma.hbm_to_vmem [thread:$0]  %s0, 128, %s17, [#allocation3], 64, 64, 4
    $region5: #{tpu_custom_call.1} parent=1 // pred_fallthru
      _
    // Predicated region
    $region6: #{tpu_custom_call.1} parent=1 // pred_check
      _
    $region7: #{tpu_custom_call.1} parent=1 // pred_check_branch
      %24 = sbr.rel (0) target = $region9
    $region8: #{tpu_custom_call.1} parent=1 // pred_region
      %s26 = ssub.s32 1024, 1024
      %27 = vsyncadd [#allocation6], %s26
      %s28 = sshll.u32 [#allocation5], 4
      %s29 = int_to_ptr.vmem [resolvable:$true] %s28
      %34 = dma.hbm_to_vmem [thread:$0]  %s1, 1024, %s29, [#allocation6], 64, 64, 4
    $region9: #{tpu_custom_call.1} parent=1 // pred_fallthru
      _
    // Predicated region
    $region10: #{tpu_custom_call.1} parent=1 // pred_check
      _
    $region11: #{tpu_custom_call.1} parent=1 // pred_check_branch
      %36 = sbr.rel (0) target = $region13
    $region12: #{tpu_custom_call.1} parent=1 // pred_region
      _
    $region13: #{tpu_custom_call.1} parent=1 // pred_fallthru
      _
    // Predicated region
    $region14: #{tpu_custom_call.1} parent=1 // pred_check
      _
    $region15: #{tpu_custom_call.1} parent=1 // pred_check_branch
      %38 = sbr.rel (0) target = $region17
    $region16: #{tpu_custom_call.1} parent=1 // pred_region
      %39 = dma.done [#allocation3], 128
    $region17: #{tpu_custom_call.1} parent=1 // pred_fallthru
      _
    // Predicated region
    $region18: #{tpu_custom_call.1} parent=1 // pred_check
      _
    $region19: #{tpu_custom_call.1} parent=1 // pred_check_branch
      %41 = sbr.rel (0) target = $region21
    $region20: #{tpu_custom_call.1} parent=1 // pred_region
      %42 = dma.done [#allocation6], 1024
    $region21: #{tpu_custom_call.1} parent=1 // pred_fallthru
      _
    %v44 = vld [vmem:[#allocation2] sm:$0xf]
    %v45 = vld [vmem:[#allocation2 + $0x4] sm:$0xf]
    %v46 = vld [vmem:[#allocation5] sm:$0xf]
    %v47 = vld [vmem:[#allocation5 + $0x4] sm:$0xf]
    %v48 = vld [vmem:[#allocation5 + $0x8] sm:$0xf]
    %v49 = vld [vmem:[#allocation5 + $0xc] sm:$0xf]
    %v50 = vld [vmem:[#allocation5 + $0x10] sm:$0xf]
    %v51 = vld [vmem:[#allocation5 + $0x14] sm:$0xf]
    %v52 = vld [vmem:[#allocation5 + $0x18] sm:$0xf]
    %v53 = vld [vmem:[#allocation5 + $0x1c] sm:$0xf]
    %v54 = vld [vmem:[#allocation5 + $0x20] sm:$0xf]
    %v55 = vld [vmem:[#allocation5 + $0x24] sm:$0xf]
    %v56 = vld [vmem:[#allocation5 + $0x28] sm:$0xf]
    %v57 = vld [vmem:[#allocation5 + $0x2c] sm:$0xf]
    %v58 = vld [vmem:[#allocation5 + $0x30] sm:$0xf]
    %v59 = vld [vmem:[#allocation5 + $0x34] sm:$0xf]
    %v60 = vld [vmem:[#allocation5 + $0x38] sm:$0xf]
    %v61 = vld [vmem:[#allocation5 + $0x3c] sm:$0xf]
    %v62 = vld [vmem:[%s2] sm:$0x1]
    %v64 = vlaneseq
    %v65 = vshrl.u32 %v64, 7
    %v66 = vsub.s32 0, %v65
    %v67 = vrot.slane %v62, %v66
    %v71 = vunpack.c.l.b16 %v44
    %v72 = vunpack.c.l.b16 %v45
    %v73 = vpack.c.b16 %v72, %v71
    %v91 = vunpack.c.l.b16 %v46
    %v92 = vunpack.c.l.b16 %v47
    %v93 = vunpack.c.l.b16 %v48
    %v94 = vunpack.c.l.b16 %v49
    %v95 = vunpack.c.l.b16 %v50
    %v96 = vunpack.c.l.b16 %v51
    %v97 = vunpack.c.l.b16 %v52
    %v98 = vunpack.c.l.b16 %v53
    %v99 = vunpack.c.l.b16 %v54
    %v100 = vunpack.c.l.b16 %v55
    %v101 = vunpack.c.l.b16 %v56
    %v102 = vunpack.c.l.b16 %v57
    %v103 = vunpack.c.l.b16 %v58
    %v104 = vunpack.c.l.b16 %v59
    %v105 = vunpack.c.l.b16 %v60
    %v106 = vunpack.c.l.b16 %v61
    %v107 = vpack.c.b16 %v92, %v91
    %v108 = vpack.c.b16 %v94, %v93
    %v109 = vpack.c.b16 %v96, %v95
    %v110 = vpack.c.b16 %v98, %v97
    %v111 = vpack.c.b16 %v100, %v99
    %v112 = vpack.c.b16 %v102, %v101
    %v113 = vpack.c.b16 %v104, %v103
    %v114 = vpack.c.b16 %v106, %v105
    %123 = vmatprep.subr.bf16.mxu0 0
    %124 = vmatpush1.bf16.msra.mxu0 %v114
    %125 = vmatprep.subr.bf16.mxu0 0
    %126 = vmatpush1.bf16.msra.mxu0 %v113
    %127 = vmatprep.subr.bf16.mxu0 0
    %128 = vmatpush1.bf16.msra.mxu0 %v112
    %129 = vmatprep.subr.bf16.mxu0 0
    %130 = vmatpush1.bf16.msra.mxu0 %v111
    %131 = vmatprep.subr.bf16.mxu0 0
    %132 = vmatpush1.bf16.msra.mxu0 %v110
    %133 = vmatprep.subr.bf16.mxu0 0
    %134 = vmatpush1.bf16.msra.mxu0 %v109
    %135 = vmatprep.subr.bf16.mxu0 0
    %136 = vmatpush1.bf16.msra.mxu0 %v108
    %137 = vmatprep.subr.bf16.mxu0 0
    %138 = vmatpush1.bf16.msra.mxu0 %v107
    %139 = vmatprep.subr.bf16.mxu0 0
    %140 = vmatpush2.bf16.msra.mxu0 0
    %141 = vmatprep.subr.bf16.mxu0 0
    %142 = vmatpush2.bf16.msra.mxu0 0
    %143 = vmatprep.subr.bf16.mxu0 0
    %144 = vmatpush2.bf16.msra.mxu0 0
    %145 = vmatprep.subr.bf16.mxu0 0
    %146 = vmatpush2.bf16.msra.mxu0 0
    %147 = vmatprep.subr.bf16.mxu0 0
    %148 = vmatpush2.bf16.msra.mxu0 0
    %149 = vmatprep.subr.bf16.mxu0 0
    %150 = vmatpush2.bf16.msra.mxu0 0
    %151 = vmatprep.subr.bf16.mxu0 0
    %152 = vmatpush2.bf16.msra.mxu0 0
    %153 = vmatprep.subr.bf16.mxu0 0
    %154 = vmatpush2.bf16.msra.mxu0 0
    %155 = vmatprep.mubr.bf16.mxu0 0
    %156 = vmatmul.mubr.bf16.gmra.mxu0 %v73
    %v157 = vpop.f32.mrf.mxu0
    %v158 = vadd.f32 %v67, %v157
    %v159 = vpop.f32.mrf.mxu0
    %v160 = vpop.f32.mrf.mxu0
    %v161 = vadd.f32 %v67, %v160
    %v162 = vpop.f32.mrf.mxu0
    %163 = vdwg.mxu0
    %164 = vst [vmem:[#allocation7] sm:$0xff] %v158
    %165 = vst [vmem:[#allocation7 + $0x8] sm:$0xff] %v161
    // Predicated region
    $region22: #{tpu_custom_call.1} parent=1 // pred_check
      _
    $region23: #{tpu_custom_call.1} parent=1 // pred_check_branch
      %167 = sbr.rel (0) target = $region25
    $region24: #{tpu_custom_call.1} parent=1 // pred_region
      %s169 = ssub.s32 256, 256
      %170 = vsyncadd [#allocation4], %s169
      %s171 = sshll.u32 [#allocation7], 4
      %s172 = int_to_ptr.vmem [resolvable:$true] %s171
      %177 = dma.vmem_to_hbm [thread:$0]  %s172, 256, %s3, [#allocation4], 128, 128, 8
    $region25: #{tpu_custom_call.1} parent=1 // pred_fallthru
      _
    // Predicated region
    $region26: #{tpu_custom_call.1} parent=1 // pred_check
      _
    $region27: #{tpu_custom_call.1} parent=1 // pred_check_branch
      %179 = sbr.rel (0) target = $region29
    $region28: #{tpu_custom_call.1} parent=1 // pred_region
      %180 = dma.done [#allocation4], 256
    $region29: #{tpu_custom_call.1} parent=1 // pred_fallthru
      _
    %181 = vsyncpa [#allocation3], 1
    %182 = vsyncpa [#allocation6], 1
    %183 = vsyncpa [#allocation4], 1

</llo_original>
